<compile_context>
chip_gen: v7x
topology: tpu7x:2x2x1
jax: 0.10.0
libtpu: 0.0.40
codegen_flags: <defaults>
</compile_context>

<pallas_src>
import math

import jax
import jax.numpy as jnp
from jax import lax
from jax.experimental import pallas as pl
from jax.experimental.pallas import tpu as pltpu


_DN_NN = (((1,), (0,)), ((), ()))   # A(m,k) @ B(k,n)
_DN_NT = (((1,), (1,)), ((), ()))   # A(m,k) @ B(n,k)^T  (no explicit transpose of B)


def _make_kernel(use_input_biases, y_transposed):
    dn_second = _DN_NN if y_transposed else _DN_NT

    if use_input_biases:
        def kernel(x_ref, y_ref, w_ref, wc_ref, wr_ref, ws_ref,
                   o_ref, xw_ref, xc_ref):
            # x_ref: (TS1, D1)  y_ref: (D2, TS2) or (TS2, D2)  w_ref: (D1, D2)
            # wc_ref: (1, D1)   wr_ref: (1, D2)   ws_ref: (1, 1)
            # o_ref: (TS1, TS2) xw_ref: (TS1, D2) xc_ref: (TS1, 1) f32
            #
            # NOTE: j (the S2-tile axis) must stay the innermost, "arbitrary"
            # grid axis: the XW / Xc scratch computed at j == 0 is carried
            # across the whole S2 sweep for a fixed (b, i).
            j = pl.program_id(2)

            @pl.when(j == 0)
            def _():
                x = x_ref[...]
                # (X @ W_core) + w_row : folds the ones-column of [Y, 1].
                xw = lax.dot_general(x, w_ref[...], dimension_numbers=_DN_NN,
                                     preferred_element_type=jnp.float32)
                xw_ref[...] = (xw + wr_ref[...]).astype(xw_ref.dtype)
                # (X . w_col) + w_scalar : folds the ones-column of [X, 1].
                xc = jnp.sum(x.astype(jnp.float32) * wc_ref[...],
                             axis=1, keepdims=True)
                xc_ref[...] = xc + ws_ref[...]

            out = lax.dot_general(xw_ref[...], y_ref[...],
                                  dimension_numbers=dn_second,
                                  preferred_element_type=jnp.float32)
            o_ref[...] = (out + xc_ref[...]).astype(o_ref.dtype)

        return kernel

    def kernel(x_ref, y_ref, w_ref, o_ref, xw_ref):
        j = pl.program_id(2)

        @pl.when(j == 0)
        def _():
            xw = lax.dot_general(x_ref[...], w_ref[...], dimension_numbers=_DN_NN,
                                 preferred_element_type=jnp.float32)
            xw_ref[...] = xw.astype(xw_ref.dtype)

        out = lax.dot_general(xw_ref[...], y_ref[...],
                              dimension_numbers=dn_second,
                              preferred_element_type=jnp.float32)
        o_ref[...] = out.astype(o_ref.dtype)

    return kernel


def _round_up(x, m):
    return ((x + m - 1) // m) * m


def _pick_tile(size, max_tile, align):
    """Pick (tile, padded_size).  Small dims use one full-extent block (no pad);
    large dims prefer an exact divisor of `size` that is a multiple of `align`
    (avoids the jnp.pad HBM round trip); otherwise minimal padding."""
    if size <= max_tile:
        return size, size
    # Exact divisors first: no padding, no extra HBM copy.
    for t in range(max_tile, align - 1, -align):
        if size % t == 0:
            return t, size
    # Otherwise accept a small amount of padding.
    for t in range(max_tile, align - 1, -align):
        padded = _round_up(size, t)
        if padded - size <= max(t // 8, align):
            return t, padded
    return align, _round_up(size, align)


def _vmem_budget():
    """(vmem_limit cap, default max S tile) per chip generation."""
    phys = 64 << 20
    try:
        info = pltpu.get_tpu_info()
        phys = int(getattr(info, "vmem_capacity_bytes", phys))
    except Exception:
        pass
    if phys >= (128 << 20):          # v5e / v6e: 128 MiB physical VMEM
        return 96 << 20, 1024
    return 48 << 20, 512             # v7x: 64 MiB physical VMEM


def _vmem_estimate(ts1, ts2, d1, d2, in_bytes, w_bytes, out_bytes, scratch_bytes,
                   use_input_biases, y_buffers=2):
    est = 2 * ts1 * d1 * in_bytes            # X tile (double buffered)
    est += y_buffers * ts2 * d2 * in_bytes   # Y tile
    est += d1 * d2 * w_bytes                 # weight (single buffered, Buffered(1))
    est += 2 * ts1 * ts2 * out_bytes         # output tile (double buffered)
    est += ts1 * d2 * scratch_bytes          # XW scratch
    if use_input_biases:
        est += ts1 * 4 + (d1 + d2 + 1) * 4   # Xc scratch + rank-1 bias weights
    return est


def bilinear_matrix_attention(matrix_1, matrix_2, weight, use_input_biases=False,
                              *, mxu_dtype=None, out_dtype=None,
                              max_tile_s1=None, max_tile_s2=None):
    """Computes X W Y^T (+ optional input biases), matching
    BilinearMatrixAttention.forward.  mxu_dtype=jnp.bfloat16 enables bf16 MXU
    operands with f32 accumulation (fast path on v6e/v7x)."""
    B, S1, D1 = matrix_1.shape
    B2, S2, D2 = matrix_2.shape
    assert B == B2

    if use_input_biases:
        assert weight.shape == (D1 + 1, D2 + 1)
        # Rank-1 decomposition of the bias-augmented bilinear form:
        #   [X,1] W' [Y,1]^T = (X Wc + 1*w_row) Y^T + (X.w_col + w_scalar) 1^T
        w_core = weight[:D1, :D2]
        w_col = weight[:D1, D2].reshape(1, D1).astype(jnp.float32)
        w_row = weight[D1, :D2].reshape(1, D2).astype(jnp.float32)
        w_scalar = weight[D1, D2].reshape(1, 1).astype(jnp.float32)
    else:
        assert weight.shape == (D1, D2)
        w_core = weight

    # Pre-cast ONCE in the wrapper (one XLA pass) instead of per-tile in-kernel:
    # halves HBM->VMEM DMA bytes and VMEM footprint on the bf16 path.
    m1, m2 = matrix_1, matrix_2
    if mxu_dtype is not None:
        m1 = m1.astype(mxu_dtype)
        m2 = m2.astype(mxu_dtype)
        w_core = w_core.astype(mxu_dtype)

    out_dtype = matrix_1.dtype if out_dtype is None else jnp.dtype(out_dtype)
    scratch_dtype = m1.dtype if mxu_dtype is None else jnp.dtype(mxu_dtype)
    in_bytes = jnp.dtype(m1.dtype).itemsize
    w_bytes = jnp.dtype(w_core.dtype).itemsize
    out_bytes = jnp.dtype(out_dtype).itemsize
    scratch_bytes = jnp.dtype(scratch_dtype).itemsize

    cap, default_tile = _vmem_budget()
    mt1 = default_tile if max_tile_s1 is None else max_tile_s1
    mt2 = default_tile if max_tile_s2 is None else max_tile_s2

    # Lane-dense Y layout for small D2: stream (D2, ts2) tiles (full 128 lanes
    # used) instead of lane-sparse (ts2, D2) tiles.
    y_transposed = D2 < 128

    # Pick S tiles (MXU-granule aligned) and shrink until the working set fits
    # the chip's VMEM budget.
    while True:
        ts1, s1p = _pick_tile(S1, mt1, 128)
        ts2, s2p = _pick_tile(S2, mt2, 128)
        est = _vmem_estimate(ts1, ts2, D1, D2, in_bytes, w_bytes, out_bytes,
                             scratch_bytes, use_input_biases)
        if est <= int(cap * 0.9):
            break
        if mt2 > 128 and mt2 >= mt1:
            mt2 //= 2
        elif mt1 > 128:
            mt1 //= 2
        else:
            break
    # TODO(synk): add a K-tiled path (tile D2 for W / XW / the second matmul with
    # an extra "arbitrary" grid axis) so weights with D1*D2 larger than the VMEM
    # cap compile instead of failing, especially under v7x's 64 MiB.

    # v7x megacore: make sure both TensorCores get at least one (b, i) block.
    if B * (s1p // ts1) < 2 and ts1 % 16 == 0:
        ts1 //= 2

    n_j = s2p // ts2
    est = _vmem_estimate(ts1, ts2, D1, D2, in_bytes, w_bytes, out_bytes,
                         scratch_bytes, use_input_biases)
    # Deeper Y buffering when the inner step is small / DMA-latency bound.
    y_buffers = 2
    if ts1 < 256 and n_j > 2 and est + ts2 * D2 * in_bytes <= int(cap * 0.8):
        y_buffers = 3
        est += ts2 * D2 * in_bytes
    vmem_limit = max(32 << 20, min(int(est * 1.5) + (4 << 20), cap))

    # Pad only when the tile search could not find an exact divisor.
    if s1p != S1:
        m1 = jnp.pad(m1, ((0, 0), (0, s1p - S1), (0, 0)))
    y_mode = pl.Buffered(3) if y_buffers == 3 else None
    if y_transposed:
        m2 = jnp.swapaxes(m2, 1, 2)                              # (B, D2, S2)
        if s2p != S2:
            m2 = jnp.pad(m2, ((0, 0), (0, 0), (0, s2p - S2)))
        y_spec = pl.BlockSpec((pl.Squeezed(), D2, ts2), lambda b, i, j: (b, 0, j),
                              pipeline_mode=y_mode)
    else:
        if s2p != S2:
            m2 = jnp.pad(m2, ((0, 0), (0, s2p - S2), (0, 0)))
        y_spec = pl.BlockSpec((pl.Squeezed(), ts2, D2), lambda b, i, j: (b, j, 0),
                              pipeline_mode=y_mode)

    grid = (B, s1p // ts1, s2p // ts2)

    single = pl.Buffered(1)   # constant index_map -> double buffer is dead VMEM
    in_specs = [
        pl.BlockSpec((pl.Squeezed(), ts1, D1), lambda b, i, j: (b, i, 0)),
        y_spec,
        pl.BlockSpec((D1, D2), lambda b, i, j: (0, 0), pipeline_mode=single),
    ]
    inputs = [m1, m2, w_core]
    scratch = [pltpu.VMEM((ts1, D2), scratch_dtype)]
    if use_input_biases:
        in_specs += [
            pl.BlockSpec((1, D1), lambda b, i, j: (0, 0), pipeline_mode=single),
            pl.BlockSpec((1, D2), lambda b, i, j: (0, 0), pipeline_mode=single),
            pl.BlockSpec((1, 1), lambda b, i, j: (0, 0), pipeline_mode=single),
        ]
        inputs += [w_col, w_row, w_scalar]
        scratch += [pltpu.VMEM((ts1, 1), jnp.float32)]

    out_spec = pl.BlockSpec((pl.Squeezed(), ts1, ts2), lambda b, i, j: (b, i, j))

    flops = 2 * B * (s1p * D1 * D2 + s1p * s2p * D2)
    bytes_accessed = (m1.size * in_bytes
                      + m2.size * in_bytes * (s1p // ts1)   # Y re-streamed per S1 tile
                      + w_core.size * w_bytes
                      + B * s1p * s2p * out_bytes)
    cost = pl.CostEstimate(flops=flops, transcendentals=0,
                           bytes_accessed=int(bytes_accessed))

    out = pl.pallas_call(
        _make_kernel(use_input_biases, y_transposed),
        out_shape=jax.ShapeDtypeStruct((B, s1p, s2p), out_dtype),
        grid_spec=pltpu.PrefetchScalarGridSpec(
            num_scalar_prefetch=0,
            grid=grid,
            in_specs=in_specs,
            out_specs=out_spec,
            scratch_shapes=scratch,
        ),
        compiler_params=pltpu.CompilerParams(
            # Batch and S1-tile axes are parallel (v7x megacore sharding); the
            # S2-tile axis carries the XW scratch so it must stay "arbitrary"
            # and innermost.
            dimension_semantics=("parallel", "parallel", "arbitrary"),
            vmem_limit_bytes=vmem_limit,
        ),
        cost_estimate=cost,
    )(*inputs)

    if s1p != S1 or s2p != S2:
        out = out[:, :S1, :S2]
    return out


def init_weight(key, matrix_1_dim, matrix_2_dim, use_input_biases=False):
    """Deterministic xavier_uniform_ equivalent for the bilinear weight matrix."""
    d1 = matrix_1_dim + (1 if use_input_biases else 0)
    d2 = matrix_2_dim + (1 if use_input_biases else 0)
    bound = math.sqrt(6.0 / (d1 + d2))
    return jax.random.uniform(key, (d1, d2), jnp.float32, -bound, bound)


if __name__ == "__main__":
    key = jax.random.PRNGKey(0)
    k_x, k_y, k_w1, k_w2, k_x2, k_y2, k_w3 = jax.random.split(key, 7)

    B, S1, S2, D1, D2 = 2, 8, 8, 32, 32
    matrix_1 = jax.random.normal(k_x, (B, S1, D1), jnp.float32)
    matrix_2 = jax.random.normal(k_y, (B, S2, D2), jnp.float32)

    # --- case 1: use_input_biases=False (module default), f32 MXU path ---
    w = init_weight(k_w1, D1, D2, use_input_biases=False)
    out = jax.block_until_ready(bilinear_matrix_attention(matrix_1, matrix_2, w))
    ref = jnp.einsum("bik,kl,bjl->bij", matrix_1, w, matrix_2)
    assert out.shape == (B, S1, S2)
    assert jnp.allclose(out, ref, atol=1e-3, rtol=1e-3)

    # --- case 2: use_input_biases=True (rank-1 epilogue inside the kernel) ---
    wb = init_weight(k_w2, D1, D2, use_input_biases=True)
    out_b = jax.block_until_ready(
        bilinear_matrix_attention(matrix_1, matrix_2, wb, use_input_biases=True))
    m1b = jnp.concatenate([matrix_1, jnp.ones((B, S1, 1), jnp.float32)], axis=-1)
    m2b = jnp.concatenate([matrix_2, jnp.ones((B, S2, 1), jnp.float32)], axis=-1)
    ref_b = jnp.einsum("bik,kl,bjl->bij", m1b, wb, m2b)
    assert out_b.shape == (B, S1, S2)
    assert jnp.allclose(out_b, ref_b, atol=1e-3, rtol=1e-3)

    # --- case 3: bf16 MXU operands (pre-cast in wrapper) with f32 accumulation ---
    out_bf = jax.block_until_ready(
        bilinear_matrix_attention(matrix_1, matrix_2, w, mxu_dtype=jnp.bfloat16))
    assert out_bf.shape == (B, S1, S2)
    assert jnp.allclose(out_bf, ref, atol=0.25, rtol=5e-2)

    # --- case 4: tiled / padded path (multi-tile grid, scratch carried over j) ---
    Bt, S1t, S2t, D1t, D2t = 1, 300, 260, 48, 64
    m1t = jax.random.normal(k_x2, (Bt, S1t, D1t), jnp.float32)
    m2t = jax.random.normal(k_y2, (Bt, S2t, D2t), jnp.float32)
    wt = init_weight(k_w3, D1t, D2t, use_input_biases=False)
    out_t = jax.block_until_ready(
        bilinear_matrix_attention(m1t, m2t, wt, max_tile_s1=128, max_tile_s2=128))
    ref_t = jnp.einsum("bik,kl,bjl->bij", m1t, wt, m2t)
    assert out_t.shape == (Bt, S1t, S2t)
    assert jnp.allclose(out_t, ref_t, atol=0.2, rtol=2e-2)

    print("KERNEL_OK")
</pallas_src>

<mosaic_0001>
module attributes {stable_mosaic.version = 11 : i64} {
  func.func @kernel(%arg0: i32, %arg1: i32, %arg2: i32, %arg3: memref<1x8x32xf32, #tpu.memory_space<vmem>>, %arg4: memref<1x32x8xf32, #tpu.memory_space<vmem>>, %arg5: memref<32x32xf32, #tpu.memory_space<vmem>>, %arg6: memref<1x8x8xf32, #tpu.memory_space<vmem>>, %arg7: memref<8x32xf32, #tpu.memory_space<vmem>>) attributes {dimension_semantics = [#tpu.dimension_semantics<parallel>, #tpu.dimension_semantics<parallel>, #tpu.dimension_semantics<arbitrary>], iteration_bounds = array<i64: 2, 1, 1>, scalar_prefetch = 0 : i64, scratch_operands = 1 : i64, tpu.core_type = #tpu.core_type<tc>, window_params = [{transform_indices = @transform_0, window_bounds = array<i64: 1, 8, 32>}, {transform_indices = @transform_1, window_bounds = array<i64: 1, 32, 8>}, {pipeline_mode = #tpu.pipeline_mode<synchronous>, transform_indices = @transform_2, window_bounds = array<i64: 32, 32>}, {transform_indices = @transform_3, window_bounds = array<i64: 1, 8, 8>}]} {
    %c0_i32 = arith.constant 0 : i32
    %0 = arith.cmpi eq, %arg2, %c0_i32 : i32
    %1 = arith.extui %0 : i1 to i32
    %c0_i32_0 = arith.constant 0 : i32
    %2 = arith.cmpi ne, %1, %c0_i32_0 : i32
    scf.if %2 {
      %c0_8 = arith.constant 0 : index
      %c0_9 = arith.constant 0 : index
      %c0_10 = arith.constant 0 : index
      %10 = vector.load %arg3[%c0_8, %c0_9, %c0_10] : memref<1x8x32xf32, #tpu.memory_space<vmem>>, vector<1x8x32xf32>
      %11 = vector.shape_cast %10 : vector<1x8x32xf32> to vector<8x32xf32>
      %c0_11 = arith.constant 0 : index
      %c0_12 = arith.constant 0 : index
      %12 = vector.load %arg5[%c0_11, %c0_12] : memref<32x32xf32, #tpu.memory_space<vmem>>, vector<32x32xf32>
      %cst_13 = arith.constant dense<0.000000e+00> : vector<8x32xf32>
      %13 = tpu.matmul %11, %12, %cst_13 {dimension_numbers = #tpu.dot_dimension_numbers<[1], [0], [0], [1], [0, 0, 1, 1], [], []>} : vector<8x32xf32>, vector<32x32xf32>, vector<8x32xf32> -> vector<8x32xf32>
      %c0_14 = arith.constant 0 : index
      %c0_15 = arith.constant 0 : index
      %14 = vector.load %arg7[%c0_14, %c0_15] : memref<8x32xf32, #tpu.memory_space<vmem>>, vector<8x32xf32>
      tpu.vector_store %arg7[%c0_14, %c0_15], %13 {strides = array<i32>} : memref<8x32xf32, #tpu.memory_space<vmem>>, vector<8x32xf32>,
    } else {
    }
    %c0 = arith.constant 0 : index
    %c0_1 = arith.constant 0 : index
    %3 = vector.load %arg7[%c0, %c0_1] : memref<8x32xf32, #tpu.memory_space<vmem>>, vector<8x32xf32>
    %c0_2 = arith.constant 0 : index
    %c0_3 = arith.constant 0 : index
    %c0_4 = arith.constant 0 : index
    %4 = vector.load %arg4[%c0_2, %c0_3, %c0_4] : memref<1x32x8xf32, #tpu.memory_space<vmem>>, vector<1x32x8xf32>
    %5 = vector.shape_cast %4 : vector<1x32x8xf32> to vector<32x8xf32>
    %cst = arith.constant dense<0.000000e+00> : vector<8x8xf32>
    %6 = tpu.matmul %3, %5, %cst {dimension_numbers = #tpu.dot_dimension_numbers<[1], [0], [0], [1], [0, 0, 1, 1], [], []>} : vector<8x32xf32>, vector<32x8xf32>, vector<8x8xf32> -> vector<8x8xf32>
    %c0_5 = arith.constant 0 : index
    %c0_6 = arith.constant 0 : index
    %c0_7 = arith.constant 0 : index
    %7 = vector.load %arg6[%c0_5, %c0_6, %c0_7] : memref<1x8x8xf32, #tpu.memory_space<vmem>>, vector<1x8x8xf32>
    %8 = vector.shape_cast %7 : vector<1x8x8xf32> to vector<8x8xf32>
    %9 = vector.shape_cast %6 : vector<8x8xf32> to vector<1x8x8xf32>
    tpu.vector_store %arg6[%c0_5, %c0_6, %c0_7], %9 {strides = array<i32>} : memref<1x8x8xf32, #tpu.memory_space<vmem>>, vector<1x8x8xf32>,
    return
  }
  func.func @transform_0(%arg0: i32, %arg1: i32, %arg2: i32) -> (i32, i32, i32) {
    %c0_i32 = arith.constant 0 : i32
    %c0_i32_0 = arith.constant 0 : i32
    return %arg0, %arg1, %c0_i32 : i32, i32, i32
  }
  func.func @transform_1(%arg0: i32, %arg1: i32, %arg2: i32) -> (i32, i32, i32) {
    %c0_i32 = arith.constant 0 : i32
    %c0_i32_0 = arith.constant 0 : i32
    return %arg0, %c0_i32, %arg2 : i32, i32, i32
  }
  func.func @transform_2(%arg0: i32, %arg1: i32, %arg2: i32) -> (i32, i32) {
    %c0_i32 = arith.constant 0 : i32
    %c0_i32_0 = arith.constant 0 : i32
    %c0_i32_1 = arith.constant 0 : i32
    return %c0_i32, %c0_i32_0 : i32, i32
  }
  func.func @transform_3(%arg0: i32, %arg1: i32, %arg2: i32) -> (i32, i32, i32) {
    %c0_i32 = arith.constant 0 : i32
    return %arg0, %arg1, %arg2 : i32, i32, i32
  }
}

</mosaic_0001>

<llo_original>
// kernel: tpu_custom_call.1
$region0: #{tpu_custom_call.1}
  #allocation0 [shape = 'u32[]', space=smem, size = 0x4, offset = 0x4, fixed_abs, tag = 'smem constant byte address 0x4 - core index']
  #allocation1 [shape = 'u32[144,128]{1,0:T(1,128)}', space=vmem, size = 0x12000, scoped, tag = 'internal scratch']
  #allocation2 [shape = 'f32[8,32]{1,0:T(8,128)}', space=vmem, size = 0x1000, scoped, tag = 'scratch operand']
  %s0 = inlined_call_operand.vmem [shape: f32[2,8,32], index: 0, kind: input, shape index: {}]
  %s1 = inlined_call_operand.vmem [shape: f32[2,32,8], index: 1, kind: input, shape index: {}]
  %s2 = inlined_call_operand.vmem [shape: f32[32,32], index: 2, kind: input, shape index: {}]
  %s3 = inlined_call_operand.hbm [shape: f32[2,8,8], index: 3, kind: output, shape index: {}]
  %s4 = sld [smem:[#allocation0]]
  $region49: #{tpu_custom_call.1} parent=0
    _
  %s6 = ssub.s32 1, %s4
  %s7 = scalar_select 0, %s6, %s4
  $region1: #{tpu_custom_call.1} parent=0
    #allocation3 [shape = 'u8[8192]{0}', space=vmem, size = 0x2000, scoped, tag = 'output window, operand 0']
    #allocation4 [shape = 's32[2]{0}', space=sflag, size = 0x8, scoped, tag = 'scoped memory for tpu_custom_call.1']
    %8 = vsyncpa [#allocation4], 0
    %s9 = scalar_lea.sflag [#allocation4], 1
    %10 = vsyncpa %s9, 0
    loop: start=0, step=1, limit=4
    $region2: #{tpu_custom_call.1} parent=1 // loop_pre_header
      _
    $region3: #{tpu_custom_call.1} parent=1 // loop_header
      %s12 = sphi 0, %s16
      %p13 = scmp.ge.s32.totalorder %s12, 4
      %s19 = sphi 0, %s38
      %s20 = sphi 0, %s34
      %s21 = sphi 0, %s30
      %s22 = sphi 0, %s19
      %s23 = sphi 0, %s20
      %s24 = sphi 0, %s21
      %s25 = sphi 0, %s22
      %s26 = sphi 0, %s23
      %s27 = sphi 0, %s24
      %s43 = sphi 0, %s45
      %s46 = sphi 0, %s43
      %s47 = sphi 0, %s46
      %s63 = sphi 0, %s47
      %s71 = sphi 0, %s73
      %s74 = sphi 0, %s71
      %s75 = sphi 0, %s74
      %s91 = sphi 0, %s75
      %s95 = sphi 0, %s95
      %s97 = sphi 0, %s95
      %s98 = sphi 0, %s97
      %s112 = sphi 0, %s98
      %s122 = sphi 0, %s124
      %s125 = sphi 0, %s122
      %s126 = sphi 0, %s125
      %s142 = sphi 0, %s126
    $region4: #{tpu_custom_call.1} parent=1 // loop_header_branch
      %15 = sbr.rel (%p13) target = $region8
    $region5: #{tpu_custom_call.1} parent=1 // loop_body
      %s17 = ssub.s32 %s12, 1
      %s18 = ssub.s32 %s12, 2
      %s28 = sadd.s32 1, %s21
      %p29 = scmp.ge.s32.totalorder %s28, 1
      %s30 = scalar_select %p29, 0, %s28
      %s31 = sadd.s32 1, %s20
      %s32 = scalar_select %p29, %s31, %s20
      %p33 = scmp.ge.s32.totalorder %s32, 1
      %s34 = scalar_select %p33, 0, %s32
      %s35 = sadd.s32 1, %s19
      %s36 = scalar_select %p33, %s35, %s19
      %p37 = scmp.ge.s32.totalorder %s36, 2
      %s38 = scalar_select %p37, 0, %s36
      %s39 = ssub.s32 %s19, %s38
      %s40 = ssub.s32 %s20, %s34
      %s41 = sor.u32 %s39, %s40
      %p42 = scmp.eq.s32.totalorder %s41, 0
      %s44 = sadd.s32 %s43, 1
      %s45 = scalar_select %p42, %s43, %s44
      %p48 = pneg %p42
      %p49 = scmp.eq.s32.totalorder %s12, 1
      %p50 = por %p48, %p49
      %p51 = scmp.ne.s32.totalorder %s43, %s46
      %p52 = scmp.eq.s32.totalorder %s12, 0
      %p53 = por %p51, %p52
      %p54 = scmp.ne.s32.totalorder %s43, %s46
      %p55 = scmp.eq.s32.totalorder %s17, 1
      %p56 = por %p54, %p55
      %p57 = scmp.ne.s32.totalorder %s46, %s47
      %p58 = scmp.eq.s32.totalorder %s17, 0
      %p59 = por %p57, %p58
      %p60 = scmp.ne.s32.totalorder %s46, %s47
      %p61 = scmp.eq.s32.totalorder %s18, 1
      %p62 = por %p60, %p61
      %p64 = scmp.ne.s32.totalorder %s47, %s63
      %p65 = scmp.eq.s32.totalorder %s18, 0
      %p66 = por %p64, %p65
      %s67 = ssub.s32 %s19, %s38
      %s68 = ssub.s32 %s21, %s30
      %s69 = sor.u32 %s67, %s68
      %p70 = scmp.eq.s32.totalorder %s69, 0
      %s72 = sadd.s32 %s71, 1
      %s73 = scalar_select %p70, %s71, %s72
      %p76 = pneg %p70
      %p77 = scmp.eq.s32.totalorder %s12, 1
      %p78 = por %p76, %p77
      %p79 = scmp.ne.s32.totalorder %s71, %s74
      %p80 = scmp.eq.s32.totalorder %s12, 0
      %p81 = por %p79, %p80
      %p82 = scmp.ne.s32.totalorder %s71, %s74
      %p83 = scmp.eq.s32.totalorder %s17, 1
      %p84 = por %p82, %p83
      %p85 = scmp.ne.s32.totalorder %s74, %s75
      %p86 = scmp.eq.s32.totalorder %s17, 0
      %p87 = por %p85, %p86
      %p88 = scmp.ne.s32.totalorder %s74, %s75
      %p89 = scmp.eq.s32.totalorder %s18, 1
      %p90 = por %p88, %p89
      %p92 = scmp.ne.s32.totalorder %s75, %s91
      %p93 = scmp.eq.s32.totalorder %s18, 0
      %p94 = por %p92, %p93
      %s96 = sadd.s32 %s95, 1
      %p99 = scmp.eq.s32.totalorder %s12, 1
      %p100 = scmp.ne.s32.totalorder %s95, %s97
      %p101 = scmp.eq.s32.totalorder %s12, 0
      %p102 = por %p100, %p101
      %p103 = scmp.ne.s32.totalorder %s95, %s97
      %p104 = scmp.eq.s32.totalorder %s17, 1
      %p105 = por %p103, %p104
      %p106 = scmp.ne.s32.totalorder %s97, %s98
      %p107 = scmp.eq.s32.totalorder %s17, 0
      %p108 = por %p106, %p107
      %p109 = scmp.ne.s32.totalorder %s97, %s98
      %p110 = scmp.eq.s32.totalorder %s18, 1
      %p111 = por %p109, %p110
      %p113 = scmp.ne.s32.totalorder %s98, %s112
      %p114 = scmp.eq.s32.totalorder %s18, 0
      %p115 = por %p113, %p114
      %s116 = ssub.s32 %s19, %s38
      %s117 = ssub.s32 %s20, %s34
      %s118 = sor.u32 %s116, %s117
      %s119 = ssub.s32 %s21, %s30
      %s120 = sor.u32 %s118, %s119
      %p121 = scmp.eq.s32.totalorder %s120, 0
      %s123 = sadd.s32 %s122, 1
      %s124 = scalar_select %p121, %s122, %s123
      %p127 = pneg %p121
      %p128 = scmp.eq.s32.totalorder %s12, 1
      %p129 = por %p127, %p128
      %p130 = scmp.ne.s32.totalorder %s122, %s125
      %p131 = scmp.eq.s32.totalorder %s12, 0
      %p132 = por %p130, %p131
      %p133 = scmp.ne.s32.totalorder %s122, %s125
      %p134 = scmp.eq.s32.totalorder %s17, 1
      %p135 = por %p133, %p134
      %p136 = scmp.ne.s32.totalorder %s125, %s126
      %p137 = scmp.eq.s32.totalorder %s17, 0
      %p138 = por %p136, %p137
      %p139 = scmp.ne.s32.totalorder %s125, %s126
      %p140 = scmp.eq.s32.totalorder %s18, 1
      %p141 = por %p139, %p140
      %p143 = scmp.ne.s32.totalorder %s126, %s142
      %p144 = scmp.eq.s32.totalorder %s18, 0
      %p145 = por %p143, %p144
      %p146 = scmp.le.s32.totalorder 1, %s12
      %p147 = scmp.lt.s32.totalorder %s12, 3
      %p148 = pnand %p146, %p147
      %p149 = pneg %p148
      // Predicated region
      $region9: #{tpu_custom_call.1} parent=5 // pred_check
        _
      $region10: #{tpu_custom_call.1} parent=5 // pred_check_branch
        %151 = sbr.rel (%p148) target = $region12
      $region11: #{tpu_custom_call.1} parent=5 // pred_region
        %s152 = ssub.s32 %s12, 1
        // Predicated region
        $region13: #{tpu_custom_call.1} parent=11 // pred_check
          %p153 = pneg %p108
        $region14: #{tpu_custom_call.1} parent=11 // pred_check_branch
          %155 = sbr.rel (%p153) target = $region16
        $region15: #{tpu_custom_call.1} parent=11 // pred_region
          _
        $region16: #{tpu_custom_call.1} parent=11 // pred_fallthru
          _
      $region12: #{tpu_custom_call.1} parent=5 // pred_fallthru
        _
      %p156 = scmp.lt.s32.totalorder %s12, 2
      // Predicated region
      $region17: #{tpu_custom_call.1} parent=5 // pred_check
        %p157 = pneg %p156
      $region18: #{tpu_custom_call.1} parent=5 // pred_check_branch
        %159 = sbr.rel (%p157) target = $region20
      $region19: #{tpu_custom_call.1} parent=5 // pred_region
        // Predicated region
        $region21: #{tpu_custom_call.1} parent=19 // pred_check
          %p160 = pneg %p53
        $region22: #{tpu_custom_call.1} parent=19 // pred_check_branch
          %162 = sbr.rel (%p160) target = $region24
        $region23: #{tpu_custom_call.1} parent=19 // pred_region
          %p163 = scmp.lt.s32.totalorder %s19, 1
          %s164 = scalar_select %p163, %s19, 1
          %p165 = scmp.lt.s32.totalorder %s20, 0
          %s166 = scalar_select %p165, %s20, 0
          %s167 = sadd.s32 %s166, %s164
          %s168 = smul.addr %s167, 8
          %s169 = scalar_lea.vmem %s0, %s168
        $region24: #{tpu_custom_call.1} parent=19 // pred_fallthru
          _
        // Predicated region
        $region25: #{tpu_custom_call.1} parent=19 // pred_check
          %p170 = pneg %p81
        $region26: #{tpu_custom_call.1} parent=19 // pred_check_branch
          %172 = sbr.rel (%p170) target = $region28
        $region27: #{tpu_custom_call.1} parent=19 // pred_region
          %p173 = scmp.lt.s32.totalorder %s19, 1
          %s174 = scalar_select %p173, %s19, 1
          %p175 = scmp.lt.s32.totalorder %s21, 0
          %s176 = scalar_select %p175, %s21, 0
          %s177 = smul.addr %s174, 4
          %s178 = sadd.s32 %s176, %s177
          %s179 = smul.addr %s178, 8
          %s180 = scalar_lea.vmem %s1, %s179
        $region28: #{tpu_custom_call.1} parent=19 // pred_fallthru
          _
      $region20: #{tpu_custom_call.1} parent=5 // pred_fallthru
        _
      %p181 = scmp.le.s32.totalorder 1, %s12
      %p182 = scmp.lt.s32.totalorder %s12, 3
      %p183 = pnand %p181, %p182
      %p184 = pneg %p183
      // Predicated region
      $region29: #{tpu_custom_call.1} parent=5 // pred_check
        _
      $region30: #{tpu_custom_call.1} parent=5 // pred_check_branch
        %186 = sbr.rel (%p183) target = $region32
      $region31: #{tpu_custom_call.1} parent=5 // pred_region
        %s187 = ssub.s32 %s12, 1
        %p188 = scmp.lt.s32.totalorder %s22, 1
        %s189 = scalar_select %p188, %s22, 1
        %p190 = scmp.lt.s32.totalorder %s23, 0
        %s191 = scalar_select %p190, %s23, 0
        %s192 = sadd.s32 %s191, %s189
        %s193 = smul.addr %s192, 8
        %s194 = scalar_lea.vmem %s0, %s193
        %p195 = pneg %p59
        %p196 = pneg %p56
        %p197 = scmp.lt.s32.totalorder %s22, 1
        %s198 = scalar_select %p197, %s22, 1
        %p199 = scmp.lt.s32.totalorder %s24, 0
        %s200 = scalar_select %p199, %s24, 0
        %s201 = smul.addr %s198, 4
        %s202 = sadd.s32 %s200, %s201
        %s203 = smul.addr %s202, 8
        %s204 = scalar_lea.vmem %s1, %s203
        %p205 = pneg %p87
        %p206 = pneg %p84
        %p207 = pneg %p108
        %p208 = pneg %p105
        %p209 = pneg %p138
        %p210 = pneg %p135
        %s211 = sand.u32 %s125, 1
        %s212 = scalar_lea.sflag [#allocation4], %s211
        %s213 = sand.u32 %s125, 1
        %s214 = smul.addr %s213, 8
        %s215 = scalar_lea.vmem [#allocation3], %s214
        %p216 = scmp.lt.s32.totalorder %s22, 1
        %s217 = scalar_select %p216, %s22, 1
        %p218 = scmp.lt.s32.totalorder %s23, 0
        %s219 = scalar_select %p218, %s23, 0
        %s220 = sadd.s32 %s219, %s217
        %s221 = smul.addr %s220, 8
        %s222 = scalar_lea.vmem %s0, %s221
        %p223 = scmp.lt.s32.totalorder %s22, 1
        %s224 = scalar_select %p223, %s22, 1
        %p225 = scmp.lt.s32.totalorder %s24, 0
        %s226 = scalar_select %p225, %s24, 0
        %s227 = smul.addr %s224, 4
        %s228 = sadd.s32 %s226, %s227
        %s229 = smul.addr %s228, 8
        %s230 = scalar_lea.vmem %s1, %s229
        %p231 = scmp.eq.s32.totalorder %s24, 0
        // Predicated region
        $region33: #{tpu_custom_call.1} parent=31 // pred_check
          %p232 = pneg %p231
        $region34: #{tpu_custom_call.1} parent=31 // pred_check_branch
          %234 = sbr.rel (%p232) target = $region36
        $region35: #{tpu_custom_call.1} parent=31 // pred_region
          %v235 = vld [vmem:[%s222] sm:$0xff]
          %v236 = vld [vmem:[%s2] sm:$0xff]
          %v237 = vld [vmem:[%s2 + $0x8] sm:$0xff]
          %v238 = vld [vmem:[%s2 + $0x10] sm:$0xff]
          %v239 = vld [vmem:[%s2 + $0x18] sm:$0xff]
          %vm240 = vcmask 261120
          %v242 = vsel %vm240, %v235, 0
          %244 = vmatprep.subr.mxu0 0.0
          %245 = vmatpush1.msra.mxu0 %v236
          %246 = vmatprep.subr.mxu0 0.0
          %247 = vmatpush1.msra.mxu0 %v237
          %248 = vmatprep.subr.mxu0 0.0
          %249 = vmatpush1.msra.mxu0 %v238
          %250 = vmatprep.subr.mxu0 0.0
          %251 = vmatpush1.msra.mxu0 %v239
          %252 = vmatprep.subr.mxu0 0.0
          %253 = vmatpush1.msra.mxu0 0.0
          %254 = vmatprep.subr.mxu0 0.0
          %255 = vmatpush1.msra.mxu0 0.0
          %256 = vmatprep.subr.mxu0 0.0
          %257 = vmatpush1.msra.mxu0 0.0
          %258 = vmatprep.subr.mxu0 0.0
          %259 = vmatpush1.msra.mxu0 0.0
          %260 = vmatprep.subr.mxu0 0.0
          %261 = vmatpush1.msra.mxu0 0.0
          %262 = vmatprep.subr.mxu0 0.0
          %263 = vmatpush1.msra.mxu0 0.0
          %264 = vmatprep.subr.mxu0 0.0
          %265 = vmatpush1.msra.mxu0 0.0
          %266 = vmatprep.subr.mxu0 0.0
          %267 = vmatpush1.msra.mxu0 0.0
          %268 = vmatprep.subr.mxu0 0.0
          %269 = vmatpush1.msra.mxu0 0.0
          %270 = vmatprep.subr.mxu0 0.0
          %271 = vmatpush1.msra.mxu0 0.0
          %272 = vmatprep.subr.mxu0 0.0
          %273 = vmatpush1.msra.mxu0 0.0
          %274 = vmatprep.subr.mxu0 0.0
          %275 = vmatpush1.msra.mxu0 0.0
          %276 = vmatprep.subr.mxu0 0.0
          %277 = vmatpush1.msra.mxu0 0.0
          %278 = vmatprep.subr.mxu0 0.0
          %279 = vmatpush1.msra.mxu0 0.0
          %280 = vmatprep.subr.mxu0 0.0
          %281 = vmatpush1.msra.mxu0 0.0
          %282 = vmatprep.subr.mxu0 0.0
          %283 = vmatpush1.msra.mxu0 0.0
          %284 = vmatprep.subr.mxu0 0.0
          %285 = vmatpush1.msra.mxu0 0.0
          %286 = vmatprep.subr.mxu0 0.0
          %287 = vmatpush1.msra.mxu0 0.0
          %288 = vmatprep.subr.mxu0 0.0
          %289 = vmatpush1.msra.mxu0 0.0
          %290 = vmatprep.subr.mxu0 0.0
          %291 = vmatpush1.msra.mxu0 0.0
          %292 = vmatprep.subr.mxu0 0.0
          %293 = vmatpush1.msra.mxu0 0.0
          %294 = vmatprep.subr.mxu0 0.0
          %295 = vmatpush1.msra.mxu0 0.0
          %296 = vmatprep.subr.mxu0 0.0
          %297 = vmatpush1.msra.mxu0 0.0
          %298 = vmatprep.subr.mxu0 0.0
          %299 = vmatpush1.msra.mxu0 0.0
          %300 = vmatprep.subr.mxu0 0.0
          %301 = vmatpush1.msra.mxu0 0.0
          %302 = vmatprep.subr.mxu0 0.0
          %303 = vmatpush1.msra.mxu0 0.0
          %304 = vmatprep.subr.mxu0 0.0
          %305 = vmatpush1.msra.mxu0 0.0
          %306 = vmatprep.subr.mxu0 0.0
          %307 = vmatpush1.msra.mxu0 0.0
          %308 = vmatprep.mubr.f32.mxu0 0.0
          %309 = vmatmul.mubr.f32.gmra.mrb[0].mxu0 %v242
          %v310 = vpop.f32.mrb[0].mxu0
          %v311 = vadd.f32 0.0, %v310
          %v312 = vpop.f32.mrb[0].mxu0
          %313 = vdwg.mxu0
          %314 = vst.msk [vmem:[#allocation2] sm:$0xff] %vm240, %v311
        $region36: #{tpu_custom_call.1} parent=31 // pred_fallthru
          _
        %v315 = vld [vmem:[#allocation2] sm:$0xff]
        %v316 = vld [vmem:[%s230] sm:$0xff]
        %v317 = vld [vmem:[%s230 + $0x8] sm:$0xff]
        %v318 = vld [vmem:[%s230 + $0x10] sm:$0xff]
        %v319 = vld [vmem:[%s230 + $0x18] sm:$0xff]
        %vm320 = vcmask 261120
        %v322 = vsel %vm320, %v315, 0
        %324 = vmatprep.subr.mxu0 0.0
        %325 = vmatpush1.msra.mxu0 %v316
        %326 = vmatprep.subr.mxu0 0.0
        %327 = vmatpush1.msra.mxu0 %v317
        %328 = vmatprep.subr.mxu0 0.0
        %329 = vmatpush1.msra.mxu0 %v318
        %330 = vmatprep.subr.mxu0 0.0
        %331 = vmatpush1.msra.mxu0 %v319
        %332 = vmatprep.subr.mxu0 0.0
        %333 = vmatpush1.msra.mxu0 0.0
        %334 = vmatprep.subr.mxu0 0.0
        %335 = vmatpush1.msra.mxu0 0.0
        %336 = vmatprep.subr.mxu0 0.0
        %337 = vmatpush1.msra.mxu0 0.0
        %338 = vmatprep.subr.mxu0 0.0
        %339 = vmatpush1.msra.mxu0 0.0
        %340 = vmatprep.subr.mxu0 0.0
        %341 = vmatpush1.msra.mxu0 0.0
        %342 = vmatprep.subr.mxu0 0.0
        %343 = vmatpush1.msra.mxu0 0.0
        %344 = vmatprep.subr.mxu0 0.0
        %345 = vmatpush1.msra.mxu0 0.0
        %346 = vmatprep.subr.mxu0 0.0
        %347 = vmatpush1.msra.mxu0 0.0
        %348 = vmatprep.subr.mxu0 0.0
        %349 = vmatpush1.msra.mxu0 0.0
        %350 = vmatprep.subr.mxu0 0.0
        %351 = vmatpush1.msra.mxu0 0.0
        %352 = vmatprep.subr.mxu0 0.0
        %353 = vmatpush1.msra.mxu0 0.0
        %354 = vmatprep.subr.mxu0 0.0
        %355 = vmatpush1.msra.mxu0 0.0
        %356 = vmatprep.subr.mxu0 0.0
        %357 = vmatpush1.msra.mxu0 0.0
        %358 = vmatprep.subr.mxu0 0.0
        %359 = vmatpush1.msra.mxu0 0.0
        %360 = vmatprep.subr.mxu0 0.0
        %361 = vmatpush1.msra.mxu0 0.0
        %362 = vmatprep.subr.mxu0 0.0
        %363 = vmatpush1.msra.mxu0 0.0
        %364 = vmatprep.subr.mxu0 0.0
        %365 = vmatpush1.msra.mxu0 0.0
        %366 = vmatprep.subr.mxu0 0.0
        %367 = vmatpush1.msra.mxu0 0.0
        %368 = vmatprep.subr.mxu0 0.0
        %369 = vmatpush1.msra.mxu0 0.0
        %370 = vmatprep.subr.mxu0 0.0
        %371 = vmatpush1.msra.mxu0 0.0
        %372 = vmatprep.subr.mxu0 0.0
        %373 = vmatpush1.msra.mxu0 0.0
        %374 = vmatprep.subr.mxu0 0.0
        %375 = vmatpush1.msra.mxu0 0.0
        %376 = vmatprep.subr.mxu0 0.0
        %377 = vmatpush1.msra.mxu0 0.0
        %378 = vmatprep.subr.mxu0 0.0
        %379 = vmatpush1.msra.mxu0 0.0
        %380 = vmatprep.subr.mxu0 0.0
        %381 = vmatpush1.msra.mxu0 0.0
        %382 = vmatprep.subr.mxu0 0.0
        %383 = vmatpush1.msra.mxu0 0.0
        %384 = vmatprep.subr.mxu0 0.0
        %385 = vmatpush1.msra.mxu0 0.0
        %386 = vmatprep.subr.mxu0 0.0
        %387 = vmatpush1.msra.mxu0 0.0
        %388 = vmatprep.mubr.f32.mxu0 0.0
        %389 = vmatmul.mubr.f32.gmra.mrb[0].mxu0 %v322
        %v390 = vpop.f32.mrb[0].mxu0
        %v391 = vadd.f32 0.0, %v390
        %v392 = vpop.f32.mrb[0].mxu0
        %393 = vdwg.mxu0
        %vm394 = vcmask 64512
        %395 = vst.msk [vmem:[%s215] sm:$0xff] %vm394, %v391
        %s396 = sand.u32 %s125, 1
        %s397 = scalar_lea.sflag [#allocation4], %s396
        %s398 = sand.u32 %s125, 1
        %s399 = smul.addr %s398, 8
        %s400 = scalar_lea.vmem [#allocation3], %s399
        // Predicated region
        $region37: #{tpu_custom_call.1} parent=31 // pred_check
          %p401 = pneg %p135
        $region38: #{tpu_custom_call.1} parent=31 // pred_check_branch
          %403 = sbr.rel (%p401) target = $region40
        $region39: #{tpu_custom_call.1} parent=31 // pred_region
          %s405 = ssub.s32 128, 128
          %406 = vsyncadd %s397, %s405
          %s407 = sadd.s32 %s24, %s23
          %s408 = sadd.s32 %s407, %s22
          %s409 = smul.addr %s408, 128
          %s410 = scalar_lea.hbm %s3, %s409
          %s412 = sshll.u32 %s400, 4
          %s413 = int_to_ptr.vmem [resolvable:$true] %s412
          %415 = dma.vmem_to_hbm [thread:$0]  %s413, 128, %s410, %s397
        $region40: #{tpu_custom_call.1} parent=31 // pred_fallthru
          _
      $region32: #{tpu_custom_call.1} parent=5 // pred_fallthru
        _
      %p416 = scmp.le.s32.totalorder 2, %s12
      // Predicated region
      $region41: #{tpu_custom_call.1} parent=5 // pred_check
        %p417 = pneg %p416
      $region42: #{tpu_custom_call.1} parent=5 // pred_check_branch
        %419 = sbr.rel (%p417) target = $region44
      $region43: #{tpu_custom_call.1} parent=5 // pred_region
        %s420 = ssub.s32 %s12, 2
        // Predicated region
        $region45: #{tpu_custom_call.1} parent=43 // pred_check
          %p421 = pneg %p141
        $region46: #{tpu_custom_call.1} parent=43 // pred_check_branch
          %423 = sbr.rel (%p421) target = $region48
        $region47: #{tpu_custom_call.1} parent=43 // pred_region
          %s424 = sand.u32 %s126, 1
          %s425 = scalar_lea.sflag [#allocation4], %s424
          %s426 = sand.u32 %s126, 1
          %s427 = smul.addr %s426, 8
          %s428 = scalar_lea.vmem [#allocation3], %s427
          %429 = dma.done %s425, 128
        $region48: #{tpu_custom_call.1} parent=43 // pred_fallthru
          _
      $region44: #{tpu_custom_call.1} parent=5 // pred_fallthru
        _
    $region6: #{tpu_custom_call.1} parent=1 // loop_footer
      %s16 = sadd.s32 1, %s12
    $region7: #{tpu_custom_call.1} parent=1 // loop_footer_branch
      %11 = sbr.rel target = $region3
    $region8: #{tpu_custom_call.1} parent=1 // loop_exit
      _
    %430 = vsyncpa [#allocation4], 1
    %s431 = scalar_lea.sflag [#allocation4], 1
    %432 = vsyncpa %s431, 1

</llo_original>
